<compile_context>
chip_gen: v5e
topology: v5e:2x2
jax: 0.10.0
libtpu: 0.0.40
codegen_flags: <defaults>
</compile_context>

<pallas_src>
import functools

import jax
import jax.numpy as jnp
from jax.experimental import pallas as pl
from jax.experimental.pallas import tpu as pltpu


def _round_up(x, m):
    return (x + m - 1) // m * m


# ------------------------------------------------------------------------- #
# Kernel 1: backbone stand-in — patch-embed matmul + LayerNorm               #
# ------------------------------------------------------------------------- #

def _patch_embed_ln_kernel(x_ref, w_ref, b_ref, gamma_ref, beta_ref, o_ref):
    """(TM, Kp) bf16 @ (Kp, D) bf16 -> f32, + bias, LayerNorm over D."""
    acc = jnp.dot(x_ref[...], w_ref[...], preferred_element_type=jnp.float32)
    acc = acc + b_ref[...]                                  # (TM, D)
    mean = jnp.mean(acc, axis=-1, keepdims=True)
    centered = acc - mean
    var = jnp.mean(centered * centered, axis=-1, keepdims=True)
    normed = centered * jax.lax.rsqrt(var + 1e-5)
    o_ref[...] = (normed * gamma_ref[...] + beta_ref[...]).astype(o_ref.dtype)


def patch_embed_ln(x_patches, w, b, gamma, beta, *, tm=256,
                   out_dtype=jnp.bfloat16):
    """x: [M, K] @ w: [K, D] + b, then LayerNorm(D).  Returns [M, D]."""
    M, K = x_patches.shape
    Kw, D = w.shape
    assert K == Kw and D % 128 == 0

    tm = min(tm, _round_up(M, 8))
    Mp = _round_up(M, tm)
    Kp = _round_up(K, 128)                                   # lane-aligned K

    x_p = jnp.zeros((Mp, Kp), jnp.bfloat16).at[:M, :K].set(
        x_patches.astype(jnp.bfloat16))
    w_p = jnp.zeros((Kp, D), jnp.bfloat16).at[:K, :].set(w.astype(jnp.bfloat16))
    b_f = b.reshape(1, D).astype(jnp.float32)
    g_f = gamma.reshape(1, D).astype(jnp.float32)
    be_f = beta.reshape(1, D).astype(jnp.float32)

    out = pl.pallas_call(
        _patch_embed_ln_kernel,
        out_shape=jax.ShapeDtypeStruct((Mp, D), out_dtype),
        grid_spec=pltpu.PrefetchScalarGridSpec(
            num_scalar_prefetch=0,
            grid=(Mp // tm,),
            in_specs=[
                pl.BlockSpec((tm, Kp), lambda i: (i, 0)),
                pl.BlockSpec((Kp, D), lambda i: (0, 0)),
                pl.BlockSpec((1, D), lambda i: (0, 0)),
                pl.BlockSpec((1, D), lambda i: (0, 0)),
                pl.BlockSpec((1, D), lambda i: (0, 0)),
            ],
            out_specs=pl.BlockSpec((tm, D), lambda i: (i, 0)),
        ),
        compiler_params=pltpu.CompilerParams(
            dimension_semantics=("parallel",)),
    )(x_p, w_p, b_f, g_f, be_f)
    return out[:M]


# ------------------------------------------------------------------------- #
# Kernel 2: MultiheadAttentionBlock (MHA + residual + LayerNorm), per pair   #
# ------------------------------------------------------------------------- #

def _mha_block_ln_kernel(x_ref, wq_ref, wk_ref, wv_ref, wo_ref,
                         bq_ref, bk_ref, bv_ref, bo_ref,
                         mask_ref, gamma_ref, beta_ref, o_ref, *, num_heads):
    x = x_ref[0]                                             # (L, E) f32
    L, E = x.shape
    hd = E // num_heads
    scale = 1.0 / float(hd) ** 0.5

    q = jnp.dot(x, wq_ref[...], preferred_element_type=jnp.float32) + bq_ref[...]
    k = jnp.dot(x, wk_ref[...], preferred_element_type=jnp.float32) + bk_ref[...]
    v = jnp.dot(x, wv_ref[...], preferred_element_type=jnp.float32) + bv_ref[...]
    mask = mask_ref[...]                                     # (L, L) additive

    # Output projection accumulated per head: attn @ Wo == sum_h head_h @ Wo[h]
    # (avoids an in-kernel concat/relayout of the narrow head slices).
    proj = jnp.zeros((L, E), jnp.float32) + bo_ref[...]
    for h in range(num_heads):
        sl = slice(h * hd, (h + 1) * hd)
        qh = q[:, sl] * scale
        kh = k[:, sl]
        vh = v[:, sl]
        # scores = qh @ kh^T without materializing a transpose
        s = jax.lax.dot_general(qh, kh, (((1,), (1,)), ((), ())),
                                preferred_element_type=jnp.float32) + mask
        s = s - jnp.max(s, axis=-1, keepdims=True)
        p = jnp.exp(s)
        p = p / jnp.sum(p, axis=-1, keepdims=True)
        head = jnp.dot(p, vh, preferred_element_type=jnp.float32)   # (L, hd)
        proj = proj + jnp.dot(head, wo_ref[sl, :],
                              preferred_element_type=jnp.float32)

    y = x + proj                       # residual; dropout == identity (eval)
    mu = jnp.mean(y, axis=-1, keepdims=True)
    yc = y - mu
    var = jnp.mean(yc * yc, axis=-1, keepdims=True)
    normed = yc * jax.lax.rsqrt(var + 1e-5)
    o_ref[0] = (normed * gamma_ref[...] + beta_ref[...]).astype(o_ref.dtype)


def mha_attention_block(x, p, mask_add, *, num_heads):
    """x: (N_pairs, L, E) f32 -> (N_pairs, L, E) f32 (self-attention block)."""
    N, L, E = x.shape
    assert E % 128 == 0 and E % num_heads == 0
    kernel = functools.partial(_mha_block_ln_kernel, num_heads=num_heads)
    row = lambda a: a.reshape(1, E).astype(jnp.float32)

    return pl.pallas_call(
        kernel,
        out_shape=jax.ShapeDtypeStruct((N, L, E), jnp.float32),
        grid_spec=pltpu.PrefetchScalarGridSpec(
            num_scalar_prefetch=0,
            grid=(N,),
            in_specs=[
                pl.BlockSpec((1, L, E), lambda i: (i, 0, 0)),   # pair features
                pl.BlockSpec((E, E), lambda i: (0, 0)),         # Wq (resident)
                pl.BlockSpec((E, E), lambda i: (0, 0)),         # Wk
                pl.BlockSpec((E, E), lambda i: (0, 0)),         # Wv
                pl.BlockSpec((E, E), lambda i: (0, 0)),         # Wo
                pl.BlockSpec((1, E), lambda i: (0, 0)),         # bq
                pl.BlockSpec((1, E), lambda i: (0, 0)),         # bk
                pl.BlockSpec((1, E), lambda i: (0, 0)),         # bv
                pl.BlockSpec((1, E), lambda i: (0, 0)),         # bo
                pl.BlockSpec((L, L), lambda i: (0, 0)),         # additive mask
                pl.BlockSpec((1, E), lambda i: (0, 0)),         # LN gamma
                pl.BlockSpec((1, E), lambda i: (0, 0)),         # LN beta
            ],
            out_specs=pl.BlockSpec((1, L, E), lambda i: (i, 0, 0)),
        ),
        compiler_params=pltpu.CompilerParams(
            dimension_semantics=("parallel",)),
    )(x.astype(jnp.float32), p["wq"], p["wk"], p["wv"], p["wo"],
      row(p["bq"]), row(p["bk"]), row(p["bv"]), row(p["bo"]),
      mask_add.astype(jnp.float32), row(p["gamma"]), row(p["beta"]))


# ------------------------------------------------------------------------- #
# Kernel 3: relation MLP head — Linear(D,256) + ReLU + Linear(256,C)         #
# ------------------------------------------------------------------------- #

def _mlp_head_kernel(x_ref, w1_ref, b1_ref, w2_ref, b2_ref, o_ref):
    h = jnp.dot(x_ref[...], w1_ref[...], preferred_element_type=jnp.float32)
    h = jnp.maximum(h + b1_ref[...], 0.0)
    o = jnp.dot(h, w2_ref[...], preferred_element_type=jnp.float32) + b2_ref[...]
    o_ref[...] = o.astype(o_ref.dtype)


def mlp_head(x, p, num_category):
    """x: (N, D) -> relation scores (N, num_category)."""
    N, E = x.shape
    hidden = p["w1"].shape[1]
    Np = _round_up(max(N, 1), 8)
    Cp = _round_up(num_category, 128)                        # lane-dense output

    x_p = jnp.zeros((Np, E), jnp.float32).at[:N].set(x.astype(jnp.float32))
    w2_p = jnp.zeros((hidden, Cp), jnp.float32).at[:, :num_category].set(p["w2"])
    b2_p = jnp.zeros((1, Cp), jnp.float32).at[:, :num_category].set(
        p["b2"].reshape(1, -1))

    out = pl.pallas_call(
        _mlp_head_kernel,
        out_shape=jax.ShapeDtypeStruct((Np, Cp), jnp.float32),
    )(x_p, p["w1"], p["b1"].reshape(1, -1).astype(jnp.float32), w2_p, b2_p)
    return out[:N, :num_category]


# ------------------------------------------------------------------------- #
# HOIModel.forward wrapper (use_attention=True, use_CLS=True, num_layers=1)  #
# ------------------------------------------------------------------------- #

def generate_attention_mask_add(num_human, num_object, num_cls):
    """Additive float mask matching HOIModel.generate_attention_mask
    (torch bool attn_mask: True == not allowed to attend)."""
    total = num_human + num_object + num_cls
    m = jnp.zeros((total, total), dtype=bool)
    m = m.at[:num_human, :num_human].set(True)
    m = m.at[num_human:num_human + num_object,
             num_human:num_human + num_object].set(True)
    if num_cls > 0:
        m = m.at[total - num_cls:, total - num_cls:].set(True)
    return jnp.where(m, jnp.float32(-1e30), jnp.float32(0.0))


def hoi_forward(images, backbone_params, head_params, *, patch_size, roi_size,
                num_heads, num_category):
    B, C, H, W = images.shape
    p = patch_size
    nh, nw = H // p, W // p
    num_patches = nh * nw

    # ---- backbone (stand-in) — Pallas kernel 1 ----
    x = images.reshape(B, C, nh, p, nw, p)
    x = jnp.transpose(x, (0, 2, 4, 1, 3, 5)).reshape(B * num_patches, C * p * p)
    feats = patch_embed_ln(x, backbone_params["w"], backbone_params["b"],
                           backbone_params["gamma"], backbone_params["beta"])
    feats = feats.astype(jnp.float32).reshape(B, nh, nw, -1)   # (B, nh, nw, D)
    cls_token = jnp.mean(feats.reshape(B, num_patches, -1), axis=1)   # (B, D)

    # TODO(synk): roi_align over per-image detection-box lists, prepare_rois,
    # and the score-sorted human/object pairing loops are data-dependent
    # Python with no static-shape Pallas equivalent; one fixed patch-aligned
    # (human, object) window pair per image stands in here.
    rs = roi_size
    human = feats[:, :rs, :rs, :].reshape(B, rs * rs, -1)
    obj = feats[:, nh - rs:, nw - rs:, :].reshape(B, rs * rs, -1)
    # torch layout is (L, N, D) with CLS at the last position; we keep (N, L, D).
    query = jnp.concatenate([human, obj, cls_token[:, None, :]], axis=1)

    mask_add = generate_attention_mask_add(rs * rs, rs * rs, 1)

    # ---- MultiheadAttentionStack (num_layers=1) — Pallas kernel 2 ----
    query_out = mha_attention_block(query, head_params, mask_add,
                                    num_heads=num_heads)

    # ---- relation MLP head — Pallas kernel 3 ----
    last_position_feature = query_out[:, -1, :]             # CLS position
    relation_scores = mlp_head(last_position_feature, head_params, num_category)

    return {"relation_scores": relation_scores, "query": query,
            "query_out": query_out, "backbone_features": feats}


# ------------------------------------------------------------------------- #
# Deterministic parameters                                                    #
# ------------------------------------------------------------------------- #

def make_backbone_params(key, in_dim, feature_dim):
    kw, kb = jax.random.split(key)
    w = (jax.random.normal(kw, (in_dim, feature_dim), jnp.float32)
         * (1.0 / jnp.sqrt(jnp.float32(in_dim))))
    b = jax.random.normal(kb, (1, feature_dim), jnp.float32) * 0.02
    return {"w": w, "b": b,
            "gamma": jnp.ones((1, feature_dim), jnp.float32),
            "beta": jnp.zeros((1, feature_dim), jnp.float32)}


def make_head_params(key, feature_dim, num_category, hidden=256):
    ks = jax.random.split(key, 10)
    D = feature_dim
    s = 1.0 / jnp.sqrt(jnp.float32(D))
    return {
        "wq": jax.random.normal(ks[0], (D, D), jnp.float32) * s,
        "wk": jax.random.normal(ks[1], (D, D), jnp.float32) * s,
        "wv": jax.random.normal(ks[2], (D, D), jnp.float32) * s,
        "wo": jax.random.normal(ks[3], (D, D), jnp.float32) * s,
        "bq": jax.random.normal(ks[4], (D,), jnp.float32) * 0.02,
        "bk": jax.random.normal(ks[5], (D,), jnp.float32) * 0.02,
        "bv": jax.random.normal(ks[6], (D,), jnp.float32) * 0.02,
        "bo": jax.random.normal(ks[7], (D,), jnp.float32) * 0.02,
        "gamma": jnp.ones((D,), jnp.float32),
        "beta": jnp.zeros((D,), jnp.float32),
        "w1": jax.random.normal(ks[8], (D, hidden), jnp.float32) * s,
        "b1": jnp.zeros((hidden,), jnp.float32),
        "w2": (jax.random.normal(ks[9], (hidden, num_category), jnp.float32)
               * (1.0 / jnp.sqrt(jnp.float32(hidden)))),
        "b2": jnp.zeros((num_category,), jnp.float32),
    }


# ------------------------------------------------------------------------- #
# Pure-JAX references for parity checks                                       #
# ------------------------------------------------------------------------- #

def _mha_block_ref(x, p, mask_add, num_heads):
    N, L, E = x.shape
    hd = E // num_heads
    scale = 1.0 / float(hd) ** 0.5
    q = x @ p["wq"] + p["bq"]
    k = x @ p["wk"] + p["bk"]
    v = x @ p["wv"] + p["bv"]
    split = lambda t: t.reshape(N, L, num_heads, hd).transpose(0, 2, 1, 3)
    qh, kh, vh = split(q), split(k), split(v)
    s = jnp.einsum("nhld,nhmd->nhlm", qh * scale, kh) + mask_add[None, None]
    w = jax.nn.softmax(s, axis=-1)
    o = jnp.einsum("nhlm,nhmd->nhld", w, vh)
    o = o.transpose(0, 2, 1, 3).reshape(N, L, E)
    y = x + (o @ p["wo"] + p["bo"])
    mu = jnp.mean(y, axis=-1, keepdims=True)
    var = jnp.mean((y - mu) ** 2, axis=-1, keepdims=True)
    return (y - mu) * jax.lax.rsqrt(var + 1e-5) * p["gamma"] + p["beta"]


def _mlp_ref(x, p):
    h = jnp.maximum(x @ p["w1"] + p["b1"], 0.0)
    return h @ p["w2"] + p["b2"]


# ------------------------------------------------------------------------- #
# main                                                                        #
# ------------------------------------------------------------------------- #

if __name__ == "__main__":
    # Small, module-consistent shapes: patch_size=14, 4x4 patch grid,
    # feature_dim scaled 768 -> 128 (lane-aligned), num_heads=8, roi_size=3,
    # 117 HOI categories, one (human, object) pair per image.
    B, C, H, W = 2, 3, 56, 56
    PATCH = 14
    FEATURE_DIM = 128
    NUM_HEADS = 8
    ROI_SIZE = 3
    NUM_CATEGORY = 117

    key = jax.random.PRNGKey(0)
    k_img, k_bb, k_head = jax.random.split(key, 3)

    images = jax.random.normal(k_img, (B, C, H, W), jnp.float32)
    backbone_params = make_backbone_params(k_bb, C * PATCH * PATCH, FEATURE_DIM)
    head_params = make_head_params(k_head, FEATURE_DIM, NUM_CATEGORY)

    out = hoi_forward(images, backbone_params, head_params,
                      patch_size=PATCH, roi_size=ROI_SIZE,
                      num_heads=NUM_HEADS, num_category=NUM_CATEGORY)
    out = jax.block_until_ready(out)

    scores = out["relation_scores"]
    num_pairs = B                                       # one pair per image
    L = 2 * ROI_SIZE * ROI_SIZE + 1
    assert scores.shape == (num_pairs, NUM_CATEGORY), scores.shape
    assert out["query_out"].shape == (num_pairs, L, FEATURE_DIM)
    assert bool(jnp.all(jnp.isfinite(scores)))

    # --- backbone parity (bf16 MXU operands -> loose tolerance) ---
    nh, nw = H // PATCH, W // PATCH
    xr = images.reshape(B, C, nh, PATCH, nw, PATCH)
    xr = jnp.transpose(xr, (0, 2, 4, 1, 3, 5)).reshape(B * nh * nw, -1)
    acc = xr @ backbone_params["w"] + backbone_params["b"]
    mu = jnp.mean(acc, axis=-1, keepdims=True)
    var = jnp.mean((acc - mu) ** 2, axis=-1, keepdims=True)
    feats_ref = ((acc - mu) * jax.lax.rsqrt(var + 1e-5)
                 * backbone_params["gamma"] + backbone_params["beta"])
    feats_ref = feats_ref.reshape(B, nh, nw, FEATURE_DIM)
    bb_err = float(jnp.max(jnp.abs(out["backbone_features"] - feats_ref)))
    assert bb_err < 0.1, f"backbone max abs err too large: {bb_err}"

    # --- attention block + MLP head parity (f32, checked against the same
    #     backbone features the kernels consumed) ---
    mask_add = generate_attention_mask_add(ROI_SIZE ** 2, ROI_SIZE ** 2, 1)
    q_ref = _mha_block_ref(out["query"], head_params, mask_add, NUM_HEADS)
    attn_err = float(jnp.max(jnp.abs(out["query_out"] - q_ref)))
    assert attn_err < 5e-2, f"attention max abs err too large: {attn_err}"

    scores_ref = _mlp_ref(q_ref[:, -1, :], head_params)
    head_err = float(jnp.max(jnp.abs(scores - scores_ref)))
    assert head_err < 5e-2, f"relation-score max abs err too large: {head_err}"

    print("KERNEL_OK")
</pallas_src>

<mosaic_0001>
module attributes {stable_mosaic.version = 11 : i64} {
  func.func @_patch_embed_ln_kernel(%arg0: i32, %arg1: memref<32x640xbf16, #tpu.memory_space<vmem>>, %arg2: memref<640x128xbf16, #tpu.memory_space<vmem>>, %arg3: memref<1x128xf32, #tpu.memory_space<vmem>>, %arg4: memref<1x128xf32, #tpu.memory_space<vmem>>, %arg5: memref<1x128xf32, #tpu.memory_space<vmem>>, %arg6: memref<32x128xbf16, #tpu.memory_space<vmem>>) attributes {dimension_semantics = [#tpu.dimension_semantics<parallel>], iteration_bounds = array<i64: 1>, scalar_prefetch = 0 : i64, scratch_operands = 0 : i64, tpu.core_type = #tpu.core_type<tc>, window_params = [{transform_indices = @transform_0, window_bounds = array<i64: 32, 640>}, {pipeline_mode = #tpu.pipeline_mode<synchronous>, transform_indices = @transform_1, window_bounds = array<i64: 640, 128>}, {pipeline_mode = #tpu.pipeline_mode<synchronous>, transform_indices = @transform_2, window_bounds = array<i64: 1, 128>}, {pipeline_mode = #tpu.pipeline_mode<synchronous>, transform_indices = @transform_3, window_bounds = array<i64: 1, 128>}, {pipeline_mode = #tpu.pipeline_mode<synchronous>, transform_indices = @transform_4, window_bounds = array<i64: 1, 128>}, {transform_indices = @transform_5, window_bounds = array<i64: 32, 128>}]} {
    %c0 = arith.constant 0 : index
    %c0_0 = arith.constant 0 : index
    %0 = vector.load %arg1[%c0, %c0_0] : memref<32x640xbf16, #tpu.memory_space<vmem>>, vector<32x640xbf16>
    %c0_1 = arith.constant 0 : index
    %c0_2 = arith.constant 0 : index
    %1 = vector.load %arg2[%c0_1, %c0_2] : memref<640x128xbf16, #tpu.memory_space<vmem>>, vector<640x128xbf16>
    %cst = arith.constant dense<0.000000e+00> : vector<32x128xf32>
    %2 = tpu.matmul %0, %1, %cst {dimension_numbers = #tpu.dot_dimension_numbers<[1], [0], [0], [1], [0, 0, 1, 1], [], []>} : vector<32x640xbf16>, vector<640x128xbf16>, vector<32x128xf32> -> vector<32x128xf32>
    %c0_3 = arith.constant 0 : index
    %c0_4 = arith.constant 0 : index
    %3 = vector.load %arg3[%c0_3, %c0_4] : memref<1x128xf32, #tpu.memory_space<vmem>>, vector<1x128xf32>
    %4 = vector.broadcast %3 : vector<1x128xf32> to vector<32x128xf32>
    %5 = arith.addf %2, %4 : vector<32x128xf32>
    %cst_5 = arith.constant dense<0.000000e+00> : vector<32xf32>
    %6 = vector.multi_reduction <add>, %5, %cst_5 [1] : vector<32x128xf32> to vector<32xf32>
    %7 = vector.shape_cast %6 : vector<32xf32> to vector<32x1xf32>
    %cst_6 = arith.constant 1.280000e+02 : f32
    %8 = vector.broadcast %cst_6 : f32 to vector<32x1xf32>
    %9 = arith.divf %7, %8 : vector<32x1xf32>
    %10 = vector.broadcast %9 : vector<32x1xf32> to vector<32x128xf32>
    %11 = arith.subf %5, %10 : vector<32x128xf32>
    %12 = arith.mulf %11, %11 : vector<32x128xf32>
    %cst_7 = arith.constant dense<0.000000e+00> : vector<32xf32>
    %13 = vector.multi_reduction <add>, %12, %cst_7 [1] : vector<32x128xf32> to vector<32xf32>
    %14 = vector.shape_cast %13 : vector<32xf32> to vector<32x1xf32>
    %cst_8 = arith.constant 1.280000e+02 : f32
    %15 = vector.broadcast %cst_8 : f32 to vector<32x1xf32>
    %16 = arith.divf %14, %15 : vector<32x1xf32>
    %cst_9 = arith.constant 9.99999974E-6 : f32
    %17 = vector.broadcast %cst_9 : f32 to vector<32x1xf32>
    %18 = arith.addf %16, %17 : vector<32x1xf32>
    %19 = math.rsqrt %18 : vector<32x1xf32>
    %20 = vector.broadcast %19 : vector<32x1xf32> to vector<32x128xf32>
    %21 = arith.mulf %11, %20 : vector<32x128xf32>
    %c0_10 = arith.constant 0 : index
    %c0_11 = arith.constant 0 : index
    %22 = vector.load %arg4[%c0_10, %c0_11] : memref<1x128xf32, #tpu.memory_space<vmem>>, vector<1x128xf32>
    %23 = vector.broadcast %22 : vector<1x128xf32> to vector<32x128xf32>
    %24 = arith.mulf %21, %23 : vector<32x128xf32>
    %c0_12 = arith.constant 0 : index
    %c0_13 = arith.constant 0 : index
    %25 = vector.load %arg5[%c0_12, %c0_13] : memref<1x128xf32, #tpu.memory_space<vmem>>, vector<1x128xf32>
    %26 = vector.broadcast %25 : vector<1x128xf32> to vector<32x128xf32>
    %27 = arith.addf %24, %26 : vector<32x128xf32>
    %28 = arith.truncf %27 : vector<32x128xf32> to vector<32x128xbf16>
    %c0_14 = arith.constant 0 : index
    %c0_15 = arith.constant 0 : index
    %29 = vector.load %arg6[%c0_14, %c0_15] : memref<32x128xbf16, #tpu.memory_space<vmem>>, vector<32x128xbf16>
    tpu.vector_store %arg6[%c0_14, %c0_15], %28 {strides = array<i32>} : memref<32x128xbf16, #tpu.memory_space<vmem>>, vector<32x128xbf16>,
    return
  }
  func.func @transform_0(%arg0: i32) -> (i32, i32) {
    %c0_i32 = arith.constant 0 : i32
    %c0_i32_0 = arith.constant 0 : i32
    return %arg0, %c0_i32 : i32, i32
  }
  func.func @transform_1(%arg0: i32) -> (i32, i32) {
    %c0_i32 = arith.constant 0 : i32
    %c0_i32_0 = arith.constant 0 : i32
    %c0_i32_1 = arith.constant 0 : i32
    return %c0_i32, %c0_i32_0 : i32, i32
  }
  func.func @transform_2(%arg0: i32) -> (i32, i32) {
    %c0_i32 = arith.constant 0 : i32
    %c0_i32_0 = arith.constant 0 : i32
    %c0_i32_1 = arith.constant 0 : i32
    return %c0_i32, %c0_i32_0 : i32, i32
  }
  func.func @transform_3(%arg0: i32) -> (i32, i32) {
    %c0_i32 = arith.constant 0 : i32
    %c0_i32_0 = arith.constant 0 : i32
    %c0_i32_1 = arith.constant 0 : i32
    return %c0_i32, %c0_i32_0 : i32, i32
  }
  func.func @transform_4(%arg0: i32) -> (i32, i32) {
    %c0_i32 = arith.constant 0 : i32
    %c0_i32_0 = arith.constant 0 : i32
    %c0_i32_1 = arith.constant 0 : i32
    return %c0_i32, %c0_i32_0 : i32, i32
  }
  func.func @transform_5(%arg0: i32) -> (i32, i32) {
    %c0_i32 = arith.constant 0 : i32
    %c0_i32_0 = arith.constant 0 : i32
    return %arg0, %c0_i32 : i32, i32
  }
}

</mosaic_0001>

<llo_original>
// kernel: tpu_custom_call.1
$region0: #{tpu_custom_call.1}
  #allocation0 [shape = 'u32[]', space=smem, size = 0x4, offset = 0x4, fixed_abs, tag = 'smem constant byte address 0x4 - core index']
  #allocation1 [shape = 'u32[72,128]{1,0:T(1,128)}', space=vmem, size = 0x9000, scoped, tag = 'internal scratch']
  %s0 = inlined_call_operand.hbm [shape: bf16[32,640], index: 0, kind: input, shape index: {}]
  %s1 = inlined_call_operand.hbm [shape: bf16[640,128], index: 1, kind: input, shape index: {}]
  %s2 = inlined_call_operand.vmem [shape: f32[1,128], index: 2, kind: input, shape index: {}]
  %s3 = inlined_call_operand.vmem [shape: f32[1,128], index: 3, kind: input, shape index: {}]
  %s4 = inlined_call_operand.vmem [shape: f32[1,128], index: 4, kind: input, shape index: {}]
  %s5 = inlined_call_operand.hbm [shape: bf16[32,128], index: 5, kind: output, shape index: {}]
  %s6 = sld [smem:[#allocation0]]
  $region38: #{tpu_custom_call.1} parent=0
    _
  %s8 = ssub.s32 1, %s6
  %s9 = scalar_select 0, %s8, %s6
  $region1: #{tpu_custom_call.1} parent=0
    #allocation2 [shape = 'u8[40960]{0}', space=vmem, size = 0xa000, scoped, tag = 'input window, operand 0, single buffered']
    #allocation3 [shape = 's32[1]{0}', space=sflag, size = 0x4, scoped, tag = 'scoped memory for tpu_custom_call.1']
    #allocation4 [shape = 's32[1]{0}', space=sflag, size = 0x4, scoped, tag = 'scoped memory for tpu_custom_call.1']
    #allocation5 [shape = 'u8[163840]{0}', space=vmem, size = 0x28000, scoped, tag = 'input window, operand 1, single buffered']
    #allocation6 [shape = 's32[1]{0}', space=sflag, size = 0x4, scoped, tag = 'scoped memory for tpu_custom_call.1']
    #allocation7 [shape = 'u8[8192]{0}', space=vmem, size = 0x2000, scoped, tag = 'output window, operand 0, single buffered']
    %10 = vsyncpa [#allocation3], 0
    %11 = vsyncpa [#allocation6], 0
    %12 = vsyncpa [#allocation4], 0
    // Predicated region
    $region2: #{tpu_custom_call.1} parent=1 // pred_check
      _
    $region3: #{tpu_custom_call.1} parent=1 // pred_check_branch
      %14 = sbr.rel (0) target = $region5
    $region4: #{tpu_custom_call.1} parent=1 // pred_region
      %16 = vsyncadd [#allocation3], 0
      %s17 = sshll.u32 %s0, 4
      %s18 = int_to_ptr.hbm [resolvable:$true] %s17
      %s19 = sshll.u32 [#allocation2], 4
      %s20 = int_to_ptr.vmem [resolvable:$true] %s19
      %25 = dma.hbm_to_vmem [thread:$0]  %s18, 1280, %s20, [#allocation3], 320, 320, 20
    $region5: #{tpu_custom_call.1} parent=1 // pred_fallthru
      _
    // Predicated region
    $region6: #{tpu_custom_call.1} parent=1 // pred_check
      _
    $region7: #{tpu_custom_call.1} parent=1 // pred_check_branch
      %27 = sbr.rel (0) target = $region9
    $region8: #{tpu_custom_call.1} parent=1 // pred_region
      %29 = vsyncadd [#allocation6], 0
      %s30 = sshll.u32 %s1, 4
      %s31 = int_to_ptr.hbm [resolvable:$true] %s30
      %s32 = sshll.u32 [#allocation5], 4
      %s33 = int_to_ptr.vmem [resolvable:$true] %s32
      %38 = dma.hbm_to_vmem [thread:$0]  %s31, 5120, %s33, [#allocation6], 64, 64, 4
    $region9: #{tpu_custom_call.1} parent=1 // pred_fallthru
      _
    // Predicated region
    $region10: #{tpu_custom_call.1} parent=1 // pred_check
      _
    $region11: #{tpu_custom_call.1} parent=1 // pred_check_branch
      %40 = sbr.rel (0) target = $region13
    $region12: #{tpu_custom_call.1} parent=1 // pred_region
      _
    $region13: #{tpu_custom_call.1} parent=1 // pred_fallthru
      _
    // Predicated region
    $region14: #{tpu_custom_call.1} parent=1 // pred_check
      _
    $region15: #{tpu_custom_call.1} parent=1 // pred_check_branch
      %42 = sbr.rel (0) target = $region17
    $region16: #{tpu_custom_call.1} parent=1 // pred_region
      _
    $region17: #{tpu_custom_call.1} parent=1 // pred_fallthru
      _
    // Predicated region
    $region18: #{tpu_custom_call.1} parent=1 // pred_check
      _
    $region19: #{tpu_custom_call.1} parent=1 // pred_check_branch
      %44 = sbr.rel (0) target = $region21
    $region20: #{tpu_custom_call.1} parent=1 // pred_region
      _
    $region21: #{tpu_custom_call.1} parent=1 // pred_fallthru
      _
    // Predicated region
    $region22: #{tpu_custom_call.1} parent=1 // pred_check
      _
    $region23: #{tpu_custom_call.1} parent=1 // pred_check_branch
      %46 = sbr.rel (0) target = $region25
    $region24: #{tpu_custom_call.1} parent=1 // pred_region
      %48 = dma.done [#allocation3], 1280
    $region25: #{tpu_custom_call.1} parent=1 // pred_fallthru
      _
    // Predicated region
    $region26: #{tpu_custom_call.1} parent=1 // pred_check
      _
    $region27: #{tpu_custom_call.1} parent=1 // pred_check_branch
      %50 = sbr.rel (0) target = $region29
    $region28: #{tpu_custom_call.1} parent=1 // pred_region
      %52 = dma.done [#allocation6], 5120
    $region29: #{tpu_custom_call.1} parent=1 // pred_fallthru
      _
    %v53 = vld [vmem:[#allocation2] sm:$0xff]
    %v54 = vld [vmem:[#allocation2 + $0x8] sm:$0xff]
    %v55 = vld [vmem:[#allocation2 + $0x10] sm:$0xf]
    %v56 = vld [vmem:[#allocation2 + $0x14] sm:$0xff]
    %v57 = vld [vmem:[#allocation2 + $0x1c] sm:$0xff]
    %v58 = vld [vmem:[#allocation2 + $0x24] sm:$0xf]
    %v59 = vld [vmem:[#allocation2 + $0x28] sm:$0xff]
    %v60 = vld [vmem:[#allocation2 + $0x30] sm:$0xff]
    %v61 = vld [vmem:[#allocation2 + $0x38] sm:$0xf]
    %v62 = vld [vmem:[#allocation2 + $0x3c] sm:$0xff]
    %v63 = vld [vmem:[#allocation2 + $0x44] sm:$0xff]
    %v64 = vld [vmem:[#allocation2 + $0x4c] sm:$0xf]
    %v65 = vld [vmem:[#allocation5] sm:$0xf]
    %v66 = vld [vmem:[#allocation5 + $0x4] sm:$0xf]
    %v67 = vld [vmem:[#allocation5 + $0x8] sm:$0xf]
    %v68 = vld [vmem:[#allocation5 + $0xc] sm:$0xf]
    %v69 = vld [vmem:[#allocation5 + $0x10] sm:$0xf]
    %v70 = vld [vmem:[#allocation5 + $0x14] sm:$0xf]
    %v71 = vld [vmem:[#allocation5 + $0x18] sm:$0xf]
    %v72 = vld [vmem:[#allocation5 + $0x1c] sm:$0xf]
    %v73 = vld [vmem:[#allocation5 + $0x20] sm:$0xf]
    %v74 = vld [vmem:[#allocation5 + $0x24] sm:$0xf]
    %v75 = vld [vmem:[#allocation5 + $0x28] sm:$0xf]
    %v76 = vld [vmem:[#allocation5 + $0x2c] sm:$0xf]
    %v77 = vld [vmem:[#allocation5 + $0x30] sm:$0xf]
    %v78 = vld [vmem:[#allocation5 + $0x34] sm:$0xf]
    %v79 = vld [vmem:[#allocation5 + $0x38] sm:$0xf]
    %v80 = vld [vmem:[#allocation5 + $0x3c] sm:$0xf]
    %v81 = vld [vmem:[#allocation5 + $0x40] sm:$0xf]
    %v82 = vld [vmem:[#allocation5 + $0x44] sm:$0xf]
    %v83 = vld [vmem:[#allocation5 + $0x48] sm:$0xf]
    %v84 = vld [vmem:[#allocation5 + $0x4c] sm:$0xf]
    %v85 = vld [vmem:[#allocation5 + $0x50] sm:$0xf]
    %v86 = vld [vmem:[#allocation5 + $0x54] sm:$0xf]
    %v87 = vld [vmem:[#allocation5 + $0x58] sm:$0xf]
    %v88 = vld [vmem:[#allocation5 + $0x5c] sm:$0xf]
    %v89 = vld [vmem:[#allocation5 + $0x60] sm:$0xf]
    %v90 = vld [vmem:[#allocation5 + $0x64] sm:$0xf]
    %v91 = vld [vmem:[#allocation5 + $0x68] sm:$0xf]
    %v92 = vld [vmem:[#allocation5 + $0x6c] sm:$0xf]
    %v93 = vld [vmem:[#allocation5 + $0x70] sm:$0xf]
    %v94 = vld [vmem:[#allocation5 + $0x74] sm:$0xf]
    %v95 = vld [vmem:[#allocation5 + $0x78] sm:$0xf]
    %v96 = vld [vmem:[#allocation5 + $0x7c] sm:$0xf]
    %v97 = vld [vmem:[#allocation5 + $0x80] sm:$0xf]
    %v98 = vld [vmem:[#allocation5 + $0x84] sm:$0xf]
    %v99 = vld [vmem:[#allocation5 + $0x88] sm:$0xf]
    %v100 = vld [vmem:[#allocation5 + $0x8c] sm:$0xf]
    %v101 = vld [vmem:[#allocation5 + $0x90] sm:$0xf]
    %v102 = vld [vmem:[#allocation5 + $0x94] sm:$0xf]
    %v103 = vld [vmem:[#allocation5 + $0x98] sm:$0xf]
    %v104 = vld [vmem:[#allocation5 + $0x9c] sm:$0xf]
    %v105 = vld [vmem:[#allocation5 + $0xa0] sm:$0xf]
    %v106 = vld [vmem:[#allocation5 + $0xa4] sm:$0xf]
    %v107 = vld [vmem:[#allocation5 + $0xa8] sm:$0xf]
    %v108 = vld [vmem:[#allocation5 + $0xac] sm:$0xf]
    %v109 = vld [vmem:[#allocation5 + $0xb0] sm:$0xf]
    %v110 = vld [vmem:[#allocation5 + $0xb4] sm:$0xf]
    %v111 = vld [vmem:[#allocation5 + $0xb8] sm:$0xf]
    %v112 = vld [vmem:[#allocation5 + $0xbc] sm:$0xf]
    %v113 = vld [vmem:[#allocation5 + $0xc0] sm:$0xf]
    %v114 = vld [vmem:[#allocation5 + $0xc4] sm:$0xf]
    %v115 = vld [vmem:[#allocation5 + $0xc8] sm:$0xf]
    %v116 = vld [vmem:[#allocation5 + $0xcc] sm:$0xf]
    %v117 = vld [vmem:[#allocation5 + $0xd0] sm:$0xf]
    %v118 = vld [vmem:[#allocation5 + $0xd4] sm:$0xf]
    %v119 = vld [vmem:[#allocation5 + $0xd8] sm:$0xf]
    %v120 = vld [vmem:[#allocation5 + $0xdc] sm:$0xf]
    %v121 = vld [vmem:[#allocation5 + $0xe0] sm:$0xf]
    %v122 = vld [vmem:[#allocation5 + $0xe4] sm:$0xf]
    %v123 = vld [vmem:[#allocation5 + $0xe8] sm:$0xf]
    %v124 = vld [vmem:[#allocation5 + $0xec] sm:$0xf]
    %v125 = vld [vmem:[#allocation5 + $0xf0] sm:$0xf]
    %v126 = vld [vmem:[#allocation5 + $0xf4] sm:$0xf]
    %v127 = vld [vmem:[#allocation5 + $0xf8] sm:$0xf]
    %v128 = vld [vmem:[#allocation5 + $0xfc] sm:$0xf]
    %v129 = vld [vmem:[#allocation5 + $0x100] sm:$0xf]
    %v130 = vld [vmem:[#allocation5 + $0x104] sm:$0xf]
    %v131 = vld [vmem:[#allocation5 + $0x108] sm:$0xf]
    %v132 = vld [vmem:[#allocation5 + $0x10c] sm:$0xf]
    %v133 = vld [vmem:[#allocation5 + $0x110] sm:$0xf]
    %v134 = vld [vmem:[#allocation5 + $0x114] sm:$0xf]
    %v135 = vld [vmem:[#allocation5 + $0x118] sm:$0xf]
    %v136 = vld [vmem:[#allocation5 + $0x11c] sm:$0xf]
    %v137 = vld [vmem:[#allocation5 + $0x120] sm:$0xf]
    %v138 = vld [vmem:[#allocation5 + $0x124] sm:$0xf]
    %v139 = vld [vmem:[#allocation5 + $0x128] sm:$0xf]
    %v140 = vld [vmem:[#allocation5 + $0x12c] sm:$0xf]
    %v141 = vld [vmem:[#allocation5 + $0x130] sm:$0xf]
    %v142 = vld [vmem:[#allocation5 + $0x134] sm:$0xf]
    %v143 = vld [vmem:[#allocation5 + $0x138] sm:$0xf]
    %v144 = vld [vmem:[#allocation5 + $0x13c] sm:$0xf]
    %v145 = vld [vmem:[%s2] sm:$0x1]
    %v147 = vperm.slane %v145, 0
    %v161 = vunpack.c.l.b16 %v53
    %v162 = vunpack.c.h.b16 %v53
    %v163 = vunpack.c.l.b16 %v54
    %v164 = vunpack.c.h.b16 %v54
    %v165 = vunpack.c.l.b16 %v55
    %v166 = vunpack.c.l.b16 %v56
    %v167 = vunpack.c.h.b16 %v56
    %v168 = vunpack.c.l.b16 %v57
    %v169 = vunpack.c.h.b16 %v57
    %v170 = vunpack.c.l.b16 %v58
    %v171 = vunpack.c.l.b16 %v59
    %v172 = vunpack.c.h.b16 %v59
    %v173 = vunpack.c.l.b16 %v60
    %v174 = vunpack.c.h.b16 %v60
    %v175 = vunpack.c.l.b16 %v61
    %v176 = vunpack.c.l.b16 %v62
    %v177 = vunpack.c.h.b16 %v62
    %v178 = vunpack.c.l.b16 %v63
    %v179 = vunpack.c.h.b16 %v63
    %v180 = vunpack.c.l.b16 %v64
    %v181 = vpack.c.b16 %v166, %v161
    %v182 = vpack.c.b16 %v167, %v162
    %v183 = vpack.c.b16 %v168, %v163
    %v184 = vpack.c.b16 %v169, %v164
    %v185 = vpack.c.b16 %v170, %v165
    %v186 = vpack.c.b16 %v176, %v171
    %v187 = vpack.c.b16 %v177, %v172
    %v188 = vpack.c.b16 %v178, %v173
    %v189 = vpack.c.b16 %v179, %v174
    %v190 = vpack.c.b16 %v180, %v175
    %v281 = vunpack.c.l.b16 %v65
    %v282 = vunpack.c.l.b16 %v66
    %v283 = vunpack.c.l.b16 %v67
    %v284 = vunpack.c.l.b16 %v68
    %v285 = vunpack.c.l.b16 %v69
    %v286 = vunpack.c.l.b16 %v70
    %v287 = vunpack.c.l.b16 %v71
    %v288 = vunpack.c.l.b16 %v72
    %v289 = vunpack.c.l.b16 %v73
    %v290 = vunpack.c.l.b16 %v74
    %v291 = vunpack.c.l.b16 %v75
    %v292 = vunpack.c.l.b16 %v76
    %v293 = vunpack.c.l.b16 %v77
    %v294 = vunpack.c.l.b16 %v78
    %v295 = vunpack.c.l.b16 %v79
    %v296 = vunpack.c.l.b16 %v80
    %v297 = vunpack.c.l.b16 %v81
    %v298 = vunpack.c.l.b16 %v82
    %v299 = vunpack.c.l.b16 %v83
    %v300 = vunpack.c.l.b16 %v84
    %v301 = vunpack.c.l.b16 %v85
    %v302 = vunpack.c.l.b16 %v86
    %v303 = vunpack.c.l.b16 %v87
    %v304 = vunpack.c.l.b16 %v88
    %v305 = vunpack.c.l.b16 %v89
    %v306 = vunpack.c.l.b16 %v90
    %v307 = vunpack.c.l.b16 %v91
    %v308 = vunpack.c.l.b16 %v92
    %v309 = vunpack.c.l.b16 %v93
    %v310 = vunpack.c.l.b16 %v94
    %v311 = vunpack.c.l.b16 %v95
    %v312 = vunpack.c.l.b16 %v96
    %v313 = vunpack.c.l.b16 %v97
    %v314 = vunpack.c.l.b16 %v98
    %v315 = vunpack.c.l.b16 %v99
    %v316 = vunpack.c.l.b16 %v100
    %v317 = vunpack.c.l.b16 %v101
    %v318 = vunpack.c.l.b16 %v102
    %v319 = vunpack.c.l.b16 %v103
    %v320 = vunpack.c.l.b16 %v104
    %v321 = vunpack.c.l.b16 %v105
    %v322 = vunpack.c.l.b16 %v106
    %v323 = vunpack.c.l.b16 %v107
    %v324 = vunpack.c.l.b16 %v108
    %v325 = vunpack.c.l.b16 %v109
    %v326 = vunpack.c.l.b16 %v110
    %v327 = vunpack.c.l.b16 %v111
    %v328 = vunpack.c.l.b16 %v112
    %v329 = vunpack.c.l.b16 %v113
    %v330 = vunpack.c.l.b16 %v114
    %v331 = vunpack.c.l.b16 %v115
    %v332 = vunpack.c.l.b16 %v116
    %v333 = vunpack.c.l.b16 %v117
    %v334 = vunpack.c.l.b16 %v118
    %v335 = vunpack.c.l.b16 %v119
    %v336 = vunpack.c.l.b16 %v120
    %v337 = vunpack.c.l.b16 %v121
    %v338 = vunpack.c.l.b16 %v122
    %v339 = vunpack.c.l.b16 %v123
    %v340 = vunpack.c.l.b16 %v124
    %v341 = vunpack.c.l.b16 %v125
    %v342 = vunpack.c.l.b16 %v126
    %v343 = vunpack.c.l.b16 %v127
    %v344 = vunpack.c.l.b16 %v128
    %v345 = vunpack.c.l.b16 %v129
    %v346 = vunpack.c.l.b16 %v130
    %v347 = vunpack.c.l.b16 %v131
    %v348 = vunpack.c.l.b16 %v132
    %v349 = vunpack.c.l.b16 %v133
    %v350 = vunpack.c.l.b16 %v134
    %v351 = vunpack.c.l.b16 %v135
    %v352 = vunpack.c.l.b16 %v136
    %v353 = vunpack.c.l.b16 %v137
    %v354 = vunpack.c.l.b16 %v138
    %v355 = vunpack.c.l.b16 %v139
    %v356 = vunpack.c.l.b16 %v140
    %v357 = vunpack.c.l.b16 %v141
    %v358 = vunpack.c.l.b16 %v142
    %v359 = vunpack.c.l.b16 %v143
    %v360 = vunpack.c.l.b16 %v144
    %v361 = vpack.c.b16 %v282, %v281
    %v362 = vpack.c.b16 %v284, %v283
    %v363 = vpack.c.b16 %v286, %v285
    %v364 = vpack.c.b16 %v288, %v287
    %v365 = vpack.c.b16 %v290, %v289
    %v366 = vpack.c.b16 %v292, %v291
    %v367 = vpack.c.b16 %v294, %v293
    %v368 = vpack.c.b16 %v296, %v295
    %v369 = vpack.c.b16 %v298, %v297
    %v370 = vpack.c.b16 %v300, %v299
    %v371 = vpack.c.b16 %v302, %v301
    %v372 = vpack.c.b16 %v304, %v303
    %v373 = vpack.c.b16 %v306, %v305
    %v374 = vpack.c.b16 %v308, %v307
    %v375 = vpack.c.b16 %v310, %v309
    %v376 = vpack.c.b16 %v312, %v311
    %v377 = vpack.c.b16 %v314, %v313
    %v378 = vpack.c.b16 %v316, %v315
    %v379 = vpack.c.b16 %v318, %v317
    %v380 = vpack.c.b16 %v320, %v319
    %v381 = vpack.c.b16 %v322, %v321
    %v382 = vpack.c.b16 %v324, %v323
    %v383 = vpack.c.b16 %v326, %v325
    %v384 = vpack.c.b16 %v328, %v327
    %v385 = vpack.c.b16 %v330, %v329
    %v386 = vpack.c.b16 %v332, %v331
    %v387 = vpack.c.b16 %v334, %v333
    %v388 = vpack.c.b16 %v336, %v335
    %v389 = vpack.c.b16 %v338, %v337
    %v390 = vpack.c.b16 %v340, %v339
    %v391 = vpack.c.b16 %v342, %v341
    %v392 = vpack.c.b16 %v344, %v343
    %v393 = vpack.c.b16 %v346, %v345
    %v394 = vpack.c.b16 %v348, %v347
    %v395 = vpack.c.b16 %v350, %v349
    %v396 = vpack.c.b16 %v352, %v351
    %v397 = vpack.c.b16 %v354, %v353
    %v398 = vpack.c.b16 %v356, %v355
    %v399 = vpack.c.b16 %v358, %v357
    %v400 = vpack.c.b16 %v360, %v359
    %441 = vmatpush.bf16.msra.mxu0 %v368
    %442 = vmatpush.bf16.msra.mxu0 %v367
    %443 = vmatpush.bf16.msra.mxu0 %v366
    %444 = vmatpush.bf16.msra.mxu0 %v365
    %445 = vmatpush.bf16.msra.mxu0 %v364
    %446 = vmatpush.bf16.msra.mxu0 %v363
    %447 = vmatpush.bf16.msra.mxu0 %v362
    %448 = vmatpush.bf16.msra.mxu0 %v361
    %449 = vmatmul.bf16.gmra.mxu0 %v181
    %v450 = vpop.f32.mrf.mxu0
    %v451 = vadd.f32 %v147, %v450
    %v452 = vpop.f32.mrf.mxu0
    %v453 = vadd.f32 %v147, %v452
    %454 = vmatmul.bf16.gmra.mxu0 %v186
    %v455 = vpop.f32.mrf.mxu0
    %v456 = vadd.f32 %v147, %v455
    %v457 = vpop.f32.mrf.mxu0
    %v458 = vadd.f32 %v147, %v457
    %459 = vdwg.mxu0
    %460 = vmatpush.bf16.msra.mxu0 %v376
    %461 = vmatpush.bf16.msra.mxu0 %v375
    %462 = vmatpush.bf16.msra.mxu0 %v374
    %463 = vmatpush.bf16.msra.mxu0 %v373
    %464 = vmatpush.bf16.msra.mxu0 %v372
    %465 = vmatpush.bf16.msra.mxu0 %v371
    %466 = vmatpush.bf16.msra.mxu0 %v370
    %467 = vmatpush.bf16.msra.mxu0 %v369
    %468 = vmatmul.bf16.gmra.mxu0 %v182
    %v469 = vpop.f32.mrf.mxu0
    %v470 = vadd.f32 %v451, %v469
    %v471 = vpop.f32.mrf.mxu0
    %v472 = vadd.f32 %v453, %v471
    %473 = vmatmul.bf16.gmra.mxu0 %v187
    %v474 = vpop.f32.mrf.mxu0
    %v475 = vadd.f32 %v456, %v474
    %v476 = vpop.f32.mrf.mxu0
    %v477 = vadd.f32 %v458, %v476
    %478 = vdwg.mxu0
    %479 = vmatpush.bf16.msra.mxu0 %v384
    %480 = vmatpush.bf16.msra.mxu0 %v383
    %481 = vmatpush.bf16.msra.mxu0 %v382
    %482 = vmatpush.bf16.msra.mxu0 %v381
    %483 = vmatpush.bf16.msra.mxu0 %v380
    %484 = vmatpush.bf16.msra.mxu0 %v379
    %485 = vmatpush.bf16.msra.mxu0 %v378
    %486 = vmatpush.bf16.msra.mxu0 %v377
    %487 = vmatmul.bf16.gmra.mxu0 %v183
    %v488 = vpop.f32.mrf.mxu0
    %v489 = vadd.f32 %v470, %v488
    %v490 = vpop.f32.mrf.mxu0
    %v491 = vadd.f32 %v472, %v490
    %492 = vmatmul.bf16.gmra.mxu0 %v188
    %v493 = vpop.f32.mrf.mxu0
    %v494 = vadd.f32 %v475, %v493
    %v495 = vpop.f32.mrf.mxu0
    %v496 = vadd.f32 %v477, %v495
    %497 = vdwg.mxu0
    %498 = vmatpush.bf16.msra.mxu0 %v392
    %499 = vmatpush.bf16.msra.mxu0 %v391
    %500 = vmatpush.bf16.msra.mxu0 %v390
    %501 = vmatpush.bf16.msra.mxu0 %v389
    %502 = vmatpush.bf16.msra.mxu0 %v388
    %503 = vmatpush.bf16.msra.mxu0 %v387
    %504 = vmatpush.bf16.msra.mxu0 %v386
    %505 = vmatpush.bf16.msra.mxu0 %v385
    %506 = vmatmul.bf16.gmra.mxu0 %v184
    %v507 = vpop.f32.mrf.mxu0
    %v508 = vadd.f32 %v489, %v507
    %v509 = vpop.f32.mrf.mxu0
    %v510 = vadd.f32 %v491, %v509
    %511 = vmatmul.bf16.gmra.mxu0 %v189
    %v512 = vpop.f32.mrf.mxu0
    %v513 = vadd.f32 %v494, %v512
    %v514 = vpop.f32.mrf.mxu0
    %v515 = vadd.f32 %v496, %v514
    %516 = vdwg.mxu0
    %517 = vmatpush.bf16.msra.mxu0 %v400
    %518 = vmatpush.bf16.msra.mxu0 %v399
    %519 = vmatpush.bf16.msra.mxu0 %v398
    %520 = vmatpush.bf16.msra.mxu0 %v397
    %521 = vmatpush.bf16.msra.mxu0 %v396
    %522 = vmatpush.bf16.msra.mxu0 %v395
    %523 = vmatpush.bf16.msra.mxu0 %v394
    %524 = vmatpush.bf16.msra.mxu0 %v393
    %525 = vmatmul.bf16.gmra.mxu0 %v185
    %v526 = vpop.f32.mrf.mxu0
    %v527 = vadd.f32 %v508, %v526
    %v528 = vpop.f32.mrf.mxu0
    %v529 = vadd.f32 %v510, %v528
    %530 = vmatmul.bf16.gmra.mxu0 %v190
    %v531 = vpop.f32.mrf.mxu0
    %v532 = vadd.f32 %v513, %v531
    %v533 = vpop.f32.mrf.mxu0
    %v534 = vadd.f32 %v515, %v533
    %535 = vdwg.mxu0
    %536 = vadd.xlane.f32.xlu0 %v527
    %v537 = vpop.xlane.xlu0 %536
    %538 = vadd.xlane.f32.xlu0 %v529
    %v539 = vpop.xlane.xlu0 %538
    %540 = vadd.xlane.f32.xlu0 %v532
    %v541 = vpop.xlane.xlu0 %540
    %542 = vadd.xlane.f32.xlu0 %v534
    %v543 = vpop.xlane.xlu0 %542
    %v544 = vrcp.pop 128.0
    %v545 = vmul.f32 128.0, %v544
    %v546 = vsub.f32 1.0, %v545
    %v547 = vmul.f32 %v544, %v546
    %v548 = vadd.f32 %v544, %v547
    %vm549 = vweird.f32 %v544
    %v550 = vsel %vm549, %v544, %v548
    %v551 = vmul.f32 %v537, %v550
    %v552 = vmul.f32 %v539, %v550
    %v553 = vmul.f32 %v541, %v550
    %v554 = vmul.f32 %v543, %v550
    %v555 = vsub.f32 %v527, %v551
    %v556 = vsub.f32 %v529, %v552
    %v557 = vsub.f32 %v532, %v553
    %v558 = vsub.f32 %v534, %v554
    %v559 = vmul.f32 %v555, %v555
    %v560 = vmul.f32 %v556, %v556
    %v561 = vmul.f32 %v557, %v557
    %v562 = vmul.f32 %v558, %v558
    %563 = vadd.xlane.f32.xlu0 %v559
    %v564 = vpop.xlane.xlu0 %563
    %565 = vadd.xlane.f32.xlu0 %v560
    %v566 = vpop.xlane.xlu0 %565
    %567 = vadd.xlane.f32.xlu0 %v561
    %v568 = vpop.xlane.xlu0 %567
    %569 = vadd.xlane.f32.xlu0 %v562
    %v570 = vpop.xlane.xlu0 %569
    %v571 = vmul.f32 %v564, %v550
    %v572 = vmul.f32 %v566, %v550
    %v573 = vmul.f32 %v568, %v550
    %v574 = vmul.f32 %v570, %v550
    %v575 = vadd.f32 %v571, 1e-05
    %v576 = vadd.f32 %v572, 1e-05
    %v577 = vadd.f32 %v573, 1e-05
    %v578 = vadd.f32 %v574, 1e-05
    %v579 = vrsqrt.pop %v575
    %v580 = vmul.f32 %v579, %v575
    %v581 = vmul.f32 %v580, %v579
    %v582 = vmul.f32 0.5, %v581
    %v583 = vsub.f32 1.5, %v582
    %v584 = vmul.f32 %v579, %v583
    %vm585 = vweird.f32 %v575
    %vm586 = vweird.f32 %v579
    %vm587 = vmor %vm585, %vm586
    %v588 = vsel %vm587, %v579, %v584
    %v589 = vrsqrt.pop %v576
    %v590 = vmul.f32 %v589, %v576
    %v591 = vmul.f32 %v590, %v589
    %v592 = vmul.f32 0.5, %v591
    %v593 = vsub.f32 1.5, %v592
    %v594 = vmul.f32 %v589, %v593
    %vm595 = vweird.f32 %v576
    %vm596 = vweird.f32 %v589
    %vm597 = vmor %vm595, %vm596
    %v598 = vsel %vm597, %v589, %v594
    %v599 = vrsqrt.pop %v577
    %v600 = vmul.f32 %v599, %v577
    %v601 = vmul.f32 %v600, %v599
    %v602 = vmul.f32 0.5, %v601
    %v603 = vsub.f32 1.5, %v602
    %v604 = vmul.f32 %v599, %v603
    %vm605 = vweird.f32 %v577
    %vm606 = vweird.f32 %v599
    %vm607 = vmor %vm605, %vm606
    %v608 = vsel %vm607, %v599, %v604
    %v609 = vrsqrt.pop %v578
    %v610 = vmul.f32 %v609, %v578
    %v611 = vmul.f32 %v610, %v609
    %v612 = vmul.f32 0.5, %v611
    %v613 = vsub.f32 1.5, %v612
    %v614 = vmul.f32 %v609, %v613
    %vm615 = vweird.f32 %v578
    %vm616 = vweird.f32 %v609
    %vm617 = vmor %vm615, %vm616
    %v618 = vsel %vm617, %v609, %v614
    %v619 = vmul.f32 %v555, %v588
    %v620 = vmul.f32 %v556, %v598
    %v621 = vmul.f32 %v557, %v608
    %v622 = vmul.f32 %v558, %v618
    %v623 = vld [vmem:[%s3] sm:$0x1]
    %v625 = vperm.slane %v623, 0
    %v627 = vmul.f32 %v619, %v625
    %v628 = vmul.f32 %v620, %v625
    %v629 = vmul.f32 %v621, %v625
    %v630 = vmul.f32 %v622, %v625
    %v631 = vld [vmem:[%s4] sm:$0x1]
    %v633 = vperm.slane %v631, 0
    %v635 = vadd.f32 %v627, %v633
    %v636 = vadd.f32 %v628, %v633
    %v637 = vadd.f32 %v629, %v633
    %v638 = vadd.f32 %v630, %v633
    %v639 = vpack.c.bf16 %v635, %v635
    %v640 = vpack.c.bf16 %v636, %v636
    %v641 = vpack.c.bf16 %v637, %v637
    %v642 = vpack.c.bf16 %v638, %v638
    %643 = vst [vmem:[#allocation7] sm:$0xf] %v639
    %644 = vst [vmem:[#allocation7 + $0x4] sm:$0xf] %v640
    %645 = vst [vmem:[#allocation7 + $0x8] sm:$0xf] %v641
    %646 = vst [vmem:[#allocation7 + $0xc] sm:$0xf] %v642
    // Predicated region
    $region30: #{tpu_custom_call.1} parent=1 // pred_check
      _
    $region31: #{tpu_custom_call.1} parent=1 // pred_check_branch
      %648 = sbr.rel (0) target = $region33
    $region32: #{tpu_custom_call.1} parent=1 // pred_region
      %650 = vsyncadd [#allocation4], 0
      %s651 = sshll.u32 [#allocation7], 4
      %s652 = int_to_ptr.vmem [resolvable:$true] %s651
      %s653 = sshll.u32 %s5, 4
      %s654 = int_to_ptr.hbm [resolvable:$true] %s653
      %659 = dma.vmem_to_hbm [thread:$0]  %s652, 256, %s654, [#allocation4], 64, 64, 4
    $region33: #{tpu_custom_call.1} parent=1 // pred_fallthru
      _
    // Predicated region
    $region34: #{tpu_custom_call.1} parent=1 // pred_check
      _
    $region35: #{tpu_custom_call.1} parent=1 // pred_check_branch
      %661 = sbr.rel (0) target = $region37
    $region36: #{tpu_custom_call.1} parent=1 // pred_region
      %663 = dma.done [#allocation4], 256
    $region37: #{tpu_custom_call.1} parent=1 // pred_fallthru
      _
    %664 = vsyncpa [#allocation3], 1
    %665 = vsyncpa [#allocation6], 1
    %666 = vsyncpa [#allocation4], 1

</llo_original>
